<compile_context>
chip_gen: v7x
topology: tpu7x:2x2x1
jax: 0.10.0
libtpu: 0.0.40
codegen_flags: <defaults>
</compile_context>

<pallas_src>
import jax
import jax.numpy as jnp
from jax import lax
from jax.experimental import pallas as pl
from jax.experimental.pallas import tpu as pltpu

LOG_CLAMP = -100.0                 # torch.nn.BCELoss clamps log terms at -100
LANES = 128
SUBLANES = 8
TARGET_BLOCK_BYTES = 2 * 1024 * 1024   # ~2 MiB per input per grid step
VMEM_LIMIT_BYTES = 40 * 1024 * 1024    # headroom for block buffers + f32 temps


def _num_tensorcores():
    """TensorCores available to the kernel (1 on v5e/v6e, 2 on v7x)."""
    try:
        info = pltpu.get_tpu_info()
    except Exception:
        return 1
    for attr in ("num_cores", "core_count", "num_tensorcores",
                 "tensorcore_count", "cores_per_chip"):
        try:
            v = int(getattr(info, attr))
        except Exception:
            continue
        if v >= 1:
            return v
    return 1


def adversarial_loss(real_output, fake_output, *, max_block_rows=None):
    """(BCELoss(real, 1) + BCELoss(fake, 0)) / 2, mean reduction (PyTorch semantics)."""
    assert real_output.shape == fake_output.shape
    n_total = int(real_output.size)
    assert n_total > 0

    itemsizes = (jnp.dtype(real_output.dtype).itemsize,
                 jnp.dtype(fake_output.dtype).itemsize)
    # Sublane alignment: 8 rows for 32-bit, 16 for 16-bit, 32 for 8-bit inputs.
    row_align = max(SUBLANES, 32 // max(min(itemsizes), 1))
    if max_block_rows is None:
        # ~2 MiB per input per block: 4096 rows (f32) / 8192 rows (bf16).
        max_block_rows = max(row_align,
                             TARGET_BLOCK_BYTES // (LANES * max(itemsizes)))

    # Lane-dense (rows, 128) view.  Only the <128-element ragged tail is ever
    # padded (no full-array copy at block/grid granularity); padded elements
    # are masked out inside the kernel, so the pad value is irrelevant.
    rows = -(-n_total // LANES)
    pad = rows * LANES - n_total
    real_flat = real_output.reshape(-1)
    fake_flat = fake_output.reshape(-1)
    if pad:
        real_flat = jnp.pad(real_flat, (0, pad))
        fake_flat = jnp.pad(fake_flat, (0, pad))
    real2d = real_flat.reshape(rows, LANES)
    fake2d = fake_flat.reshape(rows, LANES)

    if rows <= max_block_rows:
        block_rows = rows                                   # full-dim block (always legal)
    else:
        block_rows = max(row_align,
                         (max_block_rows // row_align) * row_align)

    num_blocks = -(-rows // block_rows)                      # logical blocks covering data
    n_splits = max(1, min(_num_tensorcores(), num_blocks))   # 1 on v5e/v6e, #TCs on v7x
    bpc = -(-num_blocks // n_splits)                         # blocks per core (grid axis 1)
    dup_exists = n_splits * bpc > num_blocks                 # trailing steps revisit last block
    edge_ragged = num_blocks * block_rows * LANES > n_total  # last block has invalid elems
    scale = -0.5 / float(n_total)                            # loss = -(sum_r+sum_f)*0.5/N

    if dup_exists:
        def in_map(i, j):
            # Clamp so no block is ever entirely out of bounds; the duplicate
            # visits are fully masked inside the kernel.
            return (jnp.minimum(i * bpc + j, num_blocks - 1), 0)
    else:
        def in_map(i, j):
            return (i * bpc + j, 0)

    def kernel(real_ref, fake_ref, out_ref, acc_ref):
        j = pl.program_id(1)

        @pl.when(j == 0)
        def _init():
            acc_ref[...] = jnp.zeros_like(acc_ref)

        def tile_terms():
            r = real_ref[...].astype(jnp.float32)
            f = fake_ref[...].astype(jnp.float32)
            # torch.nn.BCELoss clamps each log term at -100.
            return (jnp.maximum(jnp.log(r), LOG_CLAMP)
                    + jnp.maximum(jnp.log(1.0 - f), LOG_CLAMP))

        if edge_ragged or dup_exists:
            i = pl.program_id(0)
            blk = i * bpc + j
            if edge_ragged and dup_exists:
                needs_mask = blk >= num_blocks - 1
            elif edge_ragged:
                needs_mask = blk == num_blocks - 1
            else:
                needs_mask = blk >= num_blocks

            @pl.when(jnp.logical_not(needs_mask))
            def _full():
                acc_ref[...] += jnp.sum(tile_terms(), axis=0, keepdims=True)

            @pl.when(needs_mask)
            def _masked():
                t = tile_terms()
                row = lax.broadcasted_iota(jnp.int32, t.shape, 0)
                lane = lax.broadcasted_iota(jnp.int32, t.shape, 1)
                loaded_blk = (jnp.minimum(blk, num_blocks - 1)
                              if dup_exists else blk)
                gidx = (loaded_blk * block_rows + row) * LANES + lane
                valid = gidx < n_total
                if dup_exists:
                    valid = jnp.logical_and(valid, blk < num_blocks)
                acc_ref[...] += jnp.sum(jnp.where(valid, t, 0.0),
                                        axis=0, keepdims=True)
        else:
            acc_ref[...] += jnp.sum(tile_terms(), axis=0, keepdims=True)

        @pl.when(j == bpc - 1)
        def _finalize():
            # Per-core partial of the final loss (already scaled); the wrapper
            # just sums n_splits scalars.
            out_ref[0, 0] = jnp.sum(acc_ref[...]) * scale

    partials = pl.pallas_call(
        kernel,
        out_shape=jax.ShapeDtypeStruct((n_splits, 1), jnp.float32),
        grid=(n_splits, bpc),
        in_specs=[
            pl.BlockSpec((block_rows, LANES), in_map),
            pl.BlockSpec((block_rows, LANES), in_map),
        ],
        out_specs=pl.BlockSpec((1, 1), lambda i, j: (i, 0),
                               memory_space=pltpu.MemorySpace.SMEM),
        scratch_shapes=[pltpu.VMEM((1, LANES), jnp.float32)],
        compiler_params=pltpu.CompilerParams(
            dimension_semantics=("parallel", "arbitrary"),
            vmem_limit_bytes=VMEM_LIMIT_BYTES),
    )(real2d, fake2d)

    return jnp.sum(partials)


def _reference(real_output, fake_output):
    # Pure-JAX reference mirroring torch.nn.BCELoss semantics.
    r = real_output.astype(jnp.float32)
    f = fake_output.astype(jnp.float32)
    real_loss = jnp.mean(-jnp.maximum(jnp.log(r), LOG_CLAMP))
    fake_loss = jnp.mean(-jnp.maximum(jnp.log(1.0 - f), LOG_CLAMP))
    return (real_loss + fake_loss) * 0.5


if __name__ == "__main__":
    keys = jax.random.split(jax.random.PRNGKey(0), 8)

    # Primary example: small NCHW discriminator outputs (probabilities in (0,1)).
    shape = (2, 4, 16, 16)
    real_output = jax.nn.sigmoid(jax.random.normal(keys[0], shape, jnp.float32))
    fake_output = jax.nn.sigmoid(jax.random.normal(keys[1], shape, jnp.float32))

    loss = adversarial_loss(real_output, fake_output)
    jax.block_until_ready(loss)
    ref = _reference(real_output, fake_output)
    assert jnp.allclose(loss, ref, rtol=1e-5, atol=1e-6), (loss, ref)

    # Ragged total (not a multiple of 128): minimal (<128-element) pad + in-kernel mask.
    shape2 = (3, 5, 7, 11)
    r2 = jax.nn.sigmoid(jax.random.normal(keys[2], shape2, jnp.float32))
    f2 = jax.nn.sigmoid(jax.random.normal(keys[3], shape2, jnp.float32))
    l2 = adversarial_loss(r2, f2)
    assert jnp.allclose(l2, _reference(r2, f2), rtol=1e-4, atol=1e-6), l2

    # bf16 inputs streamed in native dtype (halved HBM traffic).
    shape3 = (2, 4, 32, 48)
    r3 = jax.nn.sigmoid(
        jax.random.normal(keys[4], shape3, jnp.float32)).astype(jnp.bfloat16)
    f3 = jax.nn.sigmoid(
        jax.random.normal(keys[5], shape3, jnp.float32)).astype(jnp.bfloat16)
    l3 = adversarial_loss(r3, f3)
    assert jnp.allclose(l3, _reference(r3, f3), rtol=1e-4, atol=1e-6), l3

    # Multi-block grid + ragged edge rows (small max_block_rows exercises the
    # accumulation / edge-mask / duplicate-block paths cheaply).
    shape4 = (2, 3, 40, 40)        # 9600 elements = 75 rows of 128
    r4 = jax.nn.sigmoid(jax.random.normal(keys[6], shape4, jnp.float32))
    f4 = jax.nn.sigmoid(jax.random.normal(keys[7], shape4, jnp.float32))
    l4 = adversarial_loss(r4, f4, max_block_rows=16)
    assert jnp.allclose(l4, _reference(r4, f4), rtol=1e-5, atol=1e-6), l4

    # Ragged tail + multi-block combined.
    l5 = adversarial_loss(r2, f2, max_block_rows=8)
    assert jnp.allclose(l5, _reference(r2, f2), rtol=1e-4, atol=1e-6), l5

    jax.block_until_ready((loss, l2, l3, l4, l5))
    print("KERNEL_OK")
</pallas_src>

<mosaic_0001>
module attributes {stable_mosaic.version = 11 : i64} {
  func.func @kernel(%arg0: i32, %arg1: i32, %arg2: memref<16x128xf32, #tpu.memory_space<vmem>>, %arg3: memref<16x128xf32, #tpu.memory_space<vmem>>, %arg4: memref<1x1xf32, #tpu.memory_space<smem>>, %arg5: memref<1x128xf32, #tpu.memory_space<vmem>>) attributes {dimension_semantics = [#tpu.dimension_semantics<parallel>, #tpu.dimension_semantics<arbitrary>], iteration_bounds = array<i64: 1, 1>, scalar_prefetch = 0 : i64, scratch_operands = 1 : i64, tpu.core_type = #tpu.core_type<tc>, window_params = [{transform_indices = @transform_0, window_bounds = array<i64: 16, 128>}, {transform_indices = @transform_1, window_bounds = array<i64: 16, 128>}, {transform_indices = @transform_2, window_bounds = array<i64: 1, 1>}]} {
    %c0_i32 = arith.constant 0 : i32
    %0 = arith.cmpi eq, %arg1, %c0_i32 : i32
    %1 = arith.extui %0 : i1 to i32
    %c0_i32_0 = arith.constant 0 : i32
    %2 = arith.cmpi ne, %1, %c0_i32_0 : i32
    scf.if %2 {
      %cst_13 = arith.constant 0.000000e+00 : f32
      %22 = vector.broadcast %cst_13 : f32 to vector<1x128xf32>
      %c0_14 = arith.constant 0 : index
      %c0_15 = arith.constant 0 : index
      %23 = vector.load %arg5[%c0_14, %c0_15] : memref<1x128xf32, #tpu.memory_space<vmem>>, vector<1x128xf32>
      tpu.vector_store %arg5[%c0_14, %c0_15], %22 {strides = array<i32>} : memref<1x128xf32, #tpu.memory_space<vmem>>, vector<1x128xf32>,
    } else {
    }
    %c0 = arith.constant 0 : index
    %c0_1 = arith.constant 0 : index
    %3 = vector.load %arg5[%c0, %c0_1] : memref<1x128xf32, #tpu.memory_space<vmem>>, vector<1x128xf32>
    %c0_2 = arith.constant 0 : index
    %c0_3 = arith.constant 0 : index
    %4 = vector.load %arg2[%c0_2, %c0_3] : memref<16x128xf32, #tpu.memory_space<vmem>>, vector<16x128xf32>
    %c0_4 = arith.constant 0 : index
    %c0_5 = arith.constant 0 : index
    %5 = vector.load %arg3[%c0_4, %c0_5] : memref<16x128xf32, #tpu.memory_space<vmem>>, vector<16x128xf32>
    %6 = math.log %4 : vector<16x128xf32>
    %cst = arith.constant -1.000000e+02 : f32
    %7 = vector.broadcast %cst : f32 to vector<16x128xf32>
    %8 = arith.maximumf %6, %7 : vector<16x128xf32>
    %cst_6 = arith.constant 1.000000e+00 : f32
    %9 = vector.broadcast %cst_6 : f32 to vector<16x128xf32>
    %10 = arith.subf %9, %5 : vector<16x128xf32>
    %11 = math.log %10 : vector<16x128xf32>
    %cst_7 = arith.constant -1.000000e+02 : f32
    %12 = vector.broadcast %cst_7 : f32 to vector<16x128xf32>
    %13 = arith.maximumf %11, %12 : vector<16x128xf32>
    %14 = arith.addf %8, %13 : vector<16x128xf32>
    %cst_8 = arith.constant dense<0.000000e+00> : vector<128xf32>
    %15 = vector.multi_reduction <add>, %14, %cst_8 [0] : vector<16x128xf32> to vector<128xf32>
    %16 = vector.shape_cast %15 : vector<128xf32> to vector<1x128xf32>
    %17 = arith.addf %3, %16 : vector<1x128xf32>
    %c0_9 = arith.constant 0 : index
    %c0_10 = arith.constant 0 : index
    %18 = vector.load %arg5[%c0_9, %c0_10] : memref<1x128xf32, #tpu.memory_space<vmem>>, vector<1x128xf32>
    tpu.vector_store %arg5[%c0_9, %c0_10], %17 {strides = array<i32>} : memref<1x128xf32, #tpu.memory_space<vmem>>, vector<1x128xf32>,
    %c0_i32_11 = arith.constant 0 : i32
    %19 = arith.cmpi eq, %arg1, %c0_i32_11 : i32
    %20 = arith.extui %19 : i1 to i32
    %c0_i32_12 = arith.constant 0 : i32
    %21 = arith.cmpi ne, %20, %c0_i32_12 : i32
    scf.if %21 {
      %c0_13 = arith.constant 0 : index
      %c0_14 = arith.constant 0 : index
      %22 = vector.load %arg5[%c0_13, %c0_14] : memref<1x128xf32, #tpu.memory_space<vmem>>, vector<1x128xf32>
      %23 = vector.shape_cast %22 : vector<1x128xf32> to vector<1x1x128xf32>
      %cst_15 = arith.constant dense<0.000000e+00> : vector<1xf32>
      %24 = vector.multi_reduction <add>, %23, %cst_15 [1, 2] : vector<1x1x128xf32> to vector<1xf32>
      %25 = vector.shape_cast %24 : vector<1xf32> to vector<1x1x1xf32>
      %26 = vector.extract %25[0, 0, 0] : f32 from vector<1x1x1xf32>
      %cst_16 = arith.constant -2.44140625E-4 : f32
      %27 = arith.mulf %26, %cst_16 : f32
      %c0_17 = arith.constant 0 : index
      %c0_18 = arith.constant 0 : index
      %28 = memref.load %arg4[%c0_17, %c0_18] : memref<1x1xf32, #tpu.memory_space<smem>>
      memref.store %27, %arg4[%c0_17, %c0_18] : memref<1x1xf32, #tpu.memory_space<smem>>
    } else {
    }
    return
  }
  func.func @transform_0(%arg0: i32, %arg1: i32) -> (i32, i32) {
    %c1_i32 = arith.constant 1 : i32
    %0 = arith.muli %arg0, %c1_i32 : i32
    %1 = arith.addi %0, %arg1 : i32
    %c0_i32 = arith.constant 0 : i32
    %c0_i32_0 = arith.constant 0 : i32
    return %1, %c0_i32 : i32, i32
  }
  func.func @transform_1(%arg0: i32, %arg1: i32) -> (i32, i32) {
    %c1_i32 = arith.constant 1 : i32
    %0 = arith.muli %arg0, %c1_i32 : i32
    %1 = arith.addi %0, %arg1 : i32
    %c0_i32 = arith.constant 0 : i32
    %c0_i32_0 = arith.constant 0 : i32
    return %1, %c0_i32 : i32, i32
  }
  func.func @transform_2(%arg0: i32, %arg1: i32) -> (i32, i32) {
    %c0_i32 = arith.constant 0 : i32
    %c0_i32_0 = arith.constant 0 : i32
    return %arg0, %c0_i32 : i32, i32
  }
}

</mosaic_0001>

<llo_original>
// kernel: tpu_custom_call.1
$region0: #{tpu_custom_call.1}
  #allocation0 [shape = 'u32[]', space=smem, size = 0x4, offset = 0x4, fixed_abs, tag = 'smem constant byte address 0x4 - core index']
  #allocation1 [shape = 'u32[144,128]{1,0:T(1,128)}', space=vmem, size = 0x12000, scoped, tag = 'internal scratch']
  #allocation2 [shape = 'f32[1,128]{1,0:T(1,128)}', space=vmem, size = 0x200, scoped, tag = 'scratch operand']
  %s0 = inlined_call_operand.hbm [shape: f32[16,128], index: 0, kind: input, shape index: {}]
  %s1 = inlined_call_operand.hbm [shape: f32[16,128], index: 1, kind: input, shape index: {}]
  %s2 = inlined_call_operand.hbm [shape: f32[1,1], index: 2, kind: output, shape index: {}]
  %s3 = sld [smem:[#allocation0]]
  $region34: #{tpu_custom_call.1} parent=0
    _
  %s5 = ssub.s32 1, %s3
  %s6 = scalar_select 0, %s5, %s3
  $region1: #{tpu_custom_call.1} parent=0
    #allocation3 [shape = 'u8[8192]{0}', space=vmem, size = 0x2000, scoped, tag = 'input window, operand 0, single buffered']
    #allocation4 [shape = 's32[1]{0}', space=sflag, size = 0x4, scoped, tag = 'scoped memory for tpu_custom_call.1']
    #allocation5 [shape = 's32[1]{0}', space=sflag, size = 0x4, scoped, tag = 'scoped memory for tpu_custom_call.1']
    #allocation6 [shape = 'u8[8192]{0}', space=vmem, size = 0x2000, scoped, tag = 'input window, operand 1, single buffered']
    #allocation7 [shape = 's32[1]{0}', space=sflag, size = 0x4, scoped, tag = 'scoped memory for tpu_custom_call.1']
    #allocation8 [shape = 'u8[512]{0}', space=smem, size = 0x200, scoped, tag = 'output window, operand 0, single buffered']
    %7 = vsyncpa [#allocation4], 0
    %8 = vsyncpa [#allocation7], 0
    %9 = vsyncpa [#allocation5], 0
    // Predicated region
    $region2: #{tpu_custom_call.1} parent=1 // pred_check
      _
    $region3: #{tpu_custom_call.1} parent=1 // pred_check_branch
      %11 = sbr.rel (0) target = $region5
    $region4: #{tpu_custom_call.1} parent=1 // pred_region
      %s12 = sadd.s32 0, 0
      %s13 = smul.u32 2, %s12
      %s15 = ssub.s32 256, 256
      %16 = vsyncadd [#allocation4], %s15
      %s17 = smul.addr %s13, 128
      %s18 = scalar_lea.hbm %s0, %s17
      %s19 = sshll.u32 [#allocation3], 4
      %s20 = int_to_ptr.vmem [resolvable:$true] %s19
      %25 = dma.hbm_to_vmem [thread:$0]  %s18, 256, %s20, [#allocation4], 128, 128, 8
    $region5: #{tpu_custom_call.1} parent=1 // pred_fallthru
      _
    // Predicated region
    $region6: #{tpu_custom_call.1} parent=1 // pred_check
      _
    $region7: #{tpu_custom_call.1} parent=1 // pred_check_branch
      %27 = sbr.rel (0) target = $region9
    $region8: #{tpu_custom_call.1} parent=1 // pred_region
      %s28 = sadd.s32 0, 0
      %s29 = smul.u32 2, %s28
      %s31 = ssub.s32 256, 256
      %32 = vsyncadd [#allocation7], %s31
      %s33 = smul.addr %s29, 128
      %s34 = scalar_lea.hbm %s1, %s33
      %s35 = sshll.u32 [#allocation6], 4
      %s36 = int_to_ptr.vmem [resolvable:$true] %s35
      %41 = dma.hbm_to_vmem [thread:$0]  %s34, 256, %s36, [#allocation7], 128, 128, 8
    $region9: #{tpu_custom_call.1} parent=1 // pred_fallthru
      _
    // Predicated region
    $region10: #{tpu_custom_call.1} parent=1 // pred_check
      _
    $region11: #{tpu_custom_call.1} parent=1 // pred_check_branch
      %43 = sbr.rel (0) target = $region13
    $region12: #{tpu_custom_call.1} parent=1 // pred_region
      %44 = dma.done [#allocation4], 256
    $region13: #{tpu_custom_call.1} parent=1 // pred_fallthru
      _
    // Predicated region
    $region14: #{tpu_custom_call.1} parent=1 // pred_check
      _
    $region15: #{tpu_custom_call.1} parent=1 // pred_check_branch
      %46 = sbr.rel (0) target = $region17
    $region16: #{tpu_custom_call.1} parent=1 // pred_region
      %47 = dma.done [#allocation7], 256
    $region17: #{tpu_custom_call.1} parent=1 // pred_fallthru
      _
    %s48 = sadd.s32 0, 0
    %s49 = smul.u32 2, %s48
    %s50 = sadd.s32 0, 0
    %s51 = smul.u32 2, %s50
    %p52 = scmp.eq.s32.totalorder 0, 0
    // Predicated region
    $region18: #{tpu_custom_call.1} parent=1 // pred_check
      %p53 = pneg %p52
    $region19: #{tpu_custom_call.1} parent=1 // pred_check_branch
      %55 = sbr.rel (%p53) target = $region21
    $region20: #{tpu_custom_call.1} parent=1 // pred_region
      %56 = vst [vmem:[#allocation2] sm:$0x1] 0.0
    $region21: #{tpu_custom_call.1} parent=1 // pred_fallthru
      _
    %v57 = vld [vmem:[#allocation2] sm:$0x1]
    %v58 = vld [vmem:[#allocation3] sm:$0xff]
    %v59 = vld [vmem:[#allocation3 + $0x8] sm:$0xff]
    %v60 = vld [vmem:[#allocation6] sm:$0xff]
    %v61 = vld [vmem:[#allocation6 + $0x8] sm:$0xff]
    %v62 = vlog2.pop %v58
    %v63 = vmul.f32 %v62, 0.6931472
    %v64 = vlog2.pop %v59
    %v65 = vmul.f32 %v64, 0.6931472
    %v66 = vmax.f32 %v63, -100.0
    %v67 = vmax.f32 %v65, -100.0
    %v68 = vsub.f32 1.0, %v60
    %v69 = vsub.f32 1.0, %v61
    %v70 = vlog2.pop %v68
    %v71 = vmul.f32 %v70, 0.6931472
    %v72 = vlog2.pop %v69
    %v73 = vmul.f32 %v72, 0.6931472
    %v74 = vmax.f32 %v71, -100.0
    %v75 = vmax.f32 %v73, -100.0
    %v76 = vadd.f32 %v66, %v74
    %v77 = vadd.f32 %v67, %v75
    %v78 = vadd.f32 %v76, %v77
    %v79 = vrot.slane %v78, 4
    %v80 = vadd.f32 %v78, %v79
    %v81 = vrot.slane %v80, 2
    %v82 = vadd.f32 %v80, %v81
    %v83 = vrot.slane %v82, 1
    %v84 = vadd.f32 %v82, %v83
    %v85 = vadd.f32 %v57, %v84
    %86 = vst [vmem:[#allocation2] sm:$0x1] %v85
    // Predicated region
    $region22: #{tpu_custom_call.1} parent=1 // pred_check
      %p87 = pneg %p52
    $region23: #{tpu_custom_call.1} parent=1 // pred_check_branch
      %89 = sbr.rel (%p87) target = $region25
    $region24: #{tpu_custom_call.1} parent=1 // pred_region
      %v90 = vld [vmem:[#allocation2] sm:$0x1]
      %vm91 = vcmask 1040384
      %v92 = vsel %vm91, %v90, 0.0
      %93 = vadd.xlane.f32.xlu0 %v92
      %v94 = vpop.xlane.xlu0 %93
      %v95 = vrot.slane %v94, 4
      %v96 = vadd.f32 %v94, %v95
      %v97 = vrot.slane %v96, 2
      %v98 = vadd.f32 %v96, %v97
      %v99 = vrot.slane %v98, 1
      %v100 = vadd.f32 %v98, %v99
      %s101 = vtos %v100
      %s102 = smul.f32 %s101, -0.00024414063
      %s103 = scalar_lea.smem [#allocation8], 0
      %104 = sst [smem:[%s103]] %s102
    $region25: #{tpu_custom_call.1} parent=1 // pred_fallthru
      _
    // Predicated region
    $region26: #{tpu_custom_call.1} parent=1 // pred_check
      _
    $region27: #{tpu_custom_call.1} parent=1 // pred_check_branch
      %106 = sbr.rel (0) target = $region29
    $region28: #{tpu_custom_call.1} parent=1 // pred_region
      %s108 = ssub.s32 16, 16
      %109 = vsyncadd [#allocation5], %s108
      %112 = dma.smem_to_hbm [#allocation8], 16, %s2, [#allocation5]
    $region29: #{tpu_custom_call.1} parent=1 // pred_fallthru
      _
    // Predicated region
    $region30: #{tpu_custom_call.1} parent=1 // pred_check
      _
    $region31: #{tpu_custom_call.1} parent=1 // pred_check_branch
      %114 = sbr.rel (0) target = $region33
    $region32: #{tpu_custom_call.1} parent=1 // pred_region
      %115 = dma.done [#allocation5], 16
    $region33: #{tpu_custom_call.1} parent=1 // pred_fallthru
      _
    %116 = sfence
    %117 = vsyncpa [#allocation4], 1
    %118 = vsyncpa [#allocation7], 1
    %119 = vsyncpa [#allocation5], 1

</llo_original>
